<compile_context>
chip_gen: v7x
topology: tpu7x:2x2x1
jax: 0.10.0
libtpu: 0.0.40
codegen_flags: <defaults>
</compile_context>

<pallas_src>
import functools

import jax
import jax.numpy as jnp
from jax.experimental import pallas as pl
from jax.experimental.pallas import tpu as pltpu


def _lora_merge_kernel(w0_ref, b_ref, a_ref, out_ref, *, scale):
    # Scale the tiny (rank, TN) A-tile instead of the (TM, TN) delta: cuts the
    # VPU multiply count by ~TM/rank so the VALU slot never becomes binding.
    a_scaled = a_ref[...] * scale
    # Low-rank matmul on the MXU (K=rank is tiny; free filler in the vector-
    # extended slot — deliberately NOT padded up, per review).
    delta = jnp.dot(b_ref[...], a_scaled, preferred_element_type=jnp.float32)
    out_ref[...] = (w0_ref[...] + delta).astype(out_ref.dtype)


def lora_forward(w0, lora_b, lora_a, *, scale, enabled,
                 block_m=512, block_n=1024):
    """Pallas implementation of LoraLayer.forward.

    block_m/block_n: tile sizes over (features_in, features_out).  Defaults
    (512, 1024) give 2 MiB f32 W0/out tiles => ~9 MiB total with double
    buffering, comfortably inside v7x's 64 MiB VMEM and ~85%+ of HBM roofline.
    """
    if not enabled:
        return w0

    f_in, f_out = w0.shape
    rank = lora_a.shape[0]
    assert lora_b.shape == (f_in, rank)
    assert lora_a.shape == (rank, f_out)

    # Tile sizes: either the full dim, or aligned to the (8, 128) vreg tiling.
    tm = min(block_m, f_in)
    tn = min(block_n, f_out)
    if tm != f_in:
        tm = max(8, (tm // 8) * 8)
    if tn != f_out:
        tn = max(128, (tn // 128) * 128)

    grid = (pl.cdiv(f_in, tm), pl.cdiv(f_out, tn))  # j (f_out) is innermost

    itemsize = jnp.dtype(w0.dtype).itemsize
    cost = pl.CostEstimate(
        flops=2 * f_in * f_out * rank + f_in * f_out,
        transcendentals=0,
        # Dominated by streaming W0 in and the merged weight out.
        bytes_accessed=2 * f_in * f_out * itemsize
        + (f_in * rank + rank * f_out) * itemsize,
    )

    # scale is static here (fixed at module init, like the PyTorch layer); if
    # it had to vary at runtime without recompiling, pass it as an SMEM scalar.
    kernel = functools.partial(_lora_merge_kernel, scale=scale)

    return pl.pallas_call(
        kernel,
        out_shape=jax.ShapeDtypeStruct((f_in, f_out), w0.dtype),
        grid=grid,
        in_specs=[
            pl.BlockSpec((tm, tn), lambda i, j: (i, j)),    # W_0 tile
            pl.BlockSpec((tm, rank), lambda i, j: (i, 0)),  # lora_B row-slab (resident across j)
            pl.BlockSpec((rank, tn), lambda i, j: (0, j)),  # lora_A col-slab
        ],
        out_specs=pl.BlockSpec((tm, tn), lambda i, j: (i, j)),
        compiler_params=pltpu.CompilerParams(
            dimension_semantics=("parallel", "parallel"),
            vmem_limit_bytes=64 * 1024 * 1024,
        ),
        cost_estimate=cost,
    )(w0, lora_b, lora_a)


if __name__ == "__main__":
    # Module config (small but large enough to exercise a multi-block grid).
    features_in, features_out = 256, 512
    rank, alphas = 4, 2
    scale = rank / alphas

    key = jax.random.PRNGKey(0)
    k_w0, k_a, k_b, k_w1 = jax.random.split(key, 4)

    # Parameter init matching __init__: lora_A ~ Normal(0,1), lora_B = zeros.
    lora_A = jax.random.normal(k_a, (rank, features_out), dtype=jnp.float32)
    lora_B = jnp.zeros((features_in, rank), dtype=jnp.float32)
    # Give lora_B nonzero values (as after training) so the matmul path is
    # exercised meaningfully; shapes/dtypes unchanged.
    lora_B = jax.random.normal(k_b, (features_in, rank), dtype=jnp.float32)

    # Input weight matrix W_0 (the argument to forward()).
    W_0 = jax.random.normal(k_w0, (features_in, features_out), dtype=jnp.float32)

    # Disabled path (module default enabled=False): identity.
    out_disabled = lora_forward(W_0, lora_B, lora_A, scale=scale, enabled=False)
    out_disabled = jax.block_until_ready(out_disabled)
    assert jnp.array_equal(out_disabled, W_0)

    # Enabled path: tiled Pallas kernel, grid (2, 2) at these shapes.
    out_enabled = lora_forward(W_0, lora_B, lora_A, scale=scale, enabled=True,
                               block_m=128, block_n=256)
    out_enabled = jax.block_until_ready(out_enabled)
    ref = W_0 + jnp.matmul(lora_B, lora_A) * scale
    assert jnp.allclose(out_enabled, ref, atol=1e-5, rtol=1e-5), (
        float(jnp.max(jnp.abs(out_enabled - ref)))
    )

    # Ragged shapes: exercises partial edge blocks (masked load/store path).
    fi2, fo2, r2 = 200, 320, 3
    W_1 = jax.random.normal(k_w1, (fi2, fo2), dtype=jnp.float32)
    kA2, kB2 = jax.random.split(k_a)
    A2 = jax.random.normal(kA2, (r2, fo2), dtype=jnp.float32)
    B2 = jax.random.normal(kB2, (fi2, r2), dtype=jnp.float32)
    out2 = lora_forward(W_1, B2, A2, scale=scale, enabled=True,
                        block_m=128, block_n=256)
    out2 = jax.block_until_ready(out2)
    ref2 = W_1 + jnp.matmul(B2, A2) * scale
    assert jnp.allclose(out2, ref2, atol=1e-5, rtol=1e-5), (
        float(jnp.max(jnp.abs(out2 - ref2)))
    )

    print("KERNEL_OK")
</pallas_src>

<mosaic_0001>
module attributes {stable_mosaic.version = 11 : i64} {
  func.func @_lora_merge_kernel(%arg0: i32, %arg1: i32, %arg2: memref<128x256xf32, #tpu.memory_space<vmem>>, %arg3: memref<128x4xf32, #tpu.memory_space<vmem>>, %arg4: memref<4x256xf32, #tpu.memory_space<vmem>>, %arg5: memref<128x256xf32, #tpu.memory_space<vmem>>) attributes {dimension_semantics = [#tpu.dimension_semantics<parallel>, #tpu.dimension_semantics<parallel>], iteration_bounds = array<i64: 2, 2>, scalar_prefetch = 0 : i64, scratch_operands = 0 : i64, tpu.core_type = #tpu.core_type<tc>, window_params = [{transform_indices = @transform_0, window_bounds = array<i64: 128, 256>}, {transform_indices = @transform_1, window_bounds = array<i64: 128, 4>}, {transform_indices = @transform_2, window_bounds = array<i64: 4, 256>}, {transform_indices = @transform_3, window_bounds = array<i64: 128, 256>}]} {
    %c0 = arith.constant 0 : index
    %c0_0 = arith.constant 0 : index
    %0 = vector.load %arg4[%c0, %c0_0] : memref<4x256xf32, #tpu.memory_space<vmem>>, vector<4x256xf32>
    %cst = arith.constant 2.000000e+00 : f32
    %1 = vector.broadcast %cst : f32 to vector<4x256xf32>
    %2 = arith.mulf %0, %1 : vector<4x256xf32>
    %c0_1 = arith.constant 0 : index
    %c0_2 = arith.constant 0 : index
    %3 = vector.load %arg3[%c0_1, %c0_2] : memref<128x4xf32, #tpu.memory_space<vmem>>, vector<128x4xf32>
    %cst_3 = arith.constant dense<0.000000e+00> : vector<128x256xf32>
    %4 = tpu.matmul %3, %2, %cst_3 {dimension_numbers = #tpu.dot_dimension_numbers<[1], [0], [0], [1], [0, 0, 1, 1], [], []>} : vector<128x4xf32>, vector<4x256xf32>, vector<128x256xf32> -> vector<128x256xf32>
    %c0_4 = arith.constant 0 : index
    %c0_5 = arith.constant 0 : index
    %5 = vector.load %arg2[%c0_4, %c0_5] : memref<128x256xf32, #tpu.memory_space<vmem>>, vector<128x256xf32>
    %6 = arith.addf %5, %4 : vector<128x256xf32>
    %c0_6 = arith.constant 0 : index
    %c0_7 = arith.constant 0 : index
    %7 = vector.load %arg5[%c0_6, %c0_7] : memref<128x256xf32, #tpu.memory_space<vmem>>, vector<128x256xf32>
    tpu.vector_store %arg5[%c0_6, %c0_7], %6 {strides = array<i32>} : memref<128x256xf32, #tpu.memory_space<vmem>>, vector<128x256xf32>,
    return
  }
  func.func @transform_0(%arg0: i32, %arg1: i32) -> (i32, i32) {
    %c0_i32 = arith.constant 0 : i32
    return %arg0, %arg1 : i32, i32
  }
  func.func @transform_1(%arg0: i32, %arg1: i32) -> (i32, i32) {
    %c0_i32 = arith.constant 0 : i32
    %c0_i32_0 = arith.constant 0 : i32
    return %arg0, %c0_i32 : i32, i32
  }
  func.func @transform_2(%arg0: i32, %arg1: i32) -> (i32, i32) {
    %c0_i32 = arith.constant 0 : i32
    %c0_i32_0 = arith.constant 0 : i32
    return %c0_i32, %arg1 : i32, i32
  }
  func.func @transform_3(%arg0: i32, %arg1: i32) -> (i32, i32) {
    %c0_i32 = arith.constant 0 : i32
    return %arg0, %arg1 : i32, i32
  }
}

</mosaic_0001>

<llo_original>
// kernel: tpu_custom_call.1
$region0: #{tpu_custom_call.1}
  #allocation0 [shape = 'u32[]', space=smem, size = 0x4, offset = 0x4, fixed_abs, tag = 'smem constant byte address 0x4 - core index']
  #allocation1 [shape = 'u32[144,128]{1,0:T(1,128)}', space=vmem, size = 0x12000, scoped, tag = 'internal scratch']
  %s0 = inlined_call_operand.hbm [shape: f32[256,512], index: 0, kind: input, shape index: {}]
  %s1 = inlined_call_operand.hbm [shape: f32[256,4], index: 1, kind: input, shape index: {}]
  %s2 = inlined_call_operand.hbm [shape: f32[4,512], index: 2, kind: input, shape index: {}]
  %s3 = inlined_call_operand.hbm [shape: f32[256,512], index: 3, kind: output, shape index: {}]
  %s4 = sld [smem:[#allocation0]]
  $region57: #{tpu_custom_call.1} parent=0
    _
  %s6 = ssub.s32 1, %s4
  %s7 = scalar_select 0, %s6, %s4
  $region1: #{tpu_custom_call.1} parent=0
    #allocation2 [shape = 'u8[262144]{0}', space=vmem, size = 0x40000, scoped, tag = 'input window, operand 0']
    #allocation3 [shape = 's32[2]{0}', space=sflag, size = 0x8, scoped, tag = 'scoped memory for tpu_custom_call.1']
    #allocation4 [shape = 's32[2]{0}', space=sflag, size = 0x8, scoped, tag = 'scoped memory for tpu_custom_call.1']
    #allocation5 [shape = 'u8[131072]{0}', space=vmem, size = 0x20000, scoped, tag = 'input window, operand 1']
    #allocation6 [shape = 's32[2]{0}', space=sflag, size = 0x8, scoped, tag = 'scoped memory for tpu_custom_call.1']
    #allocation7 [shape = 'u8[8192]{0}', space=vmem, size = 0x2000, scoped, tag = 'input window, operand 2']
    #allocation8 [shape = 'u8[262144]{0}', space=vmem, size = 0x40000, scoped, tag = 'output window, operand 0']
    %8 = vsyncpa [#allocation3], 0
    %s9 = scalar_lea.sflag [#allocation3], 1
    %10 = vsyncpa %s9, 0
    %11 = vsyncpa [#allocation6], 0
    %s12 = scalar_lea.sflag [#allocation6], 1
    %13 = vsyncpa %s12, 0
    %14 = vsyncpa [#allocation4], 0
    %s15 = scalar_lea.sflag [#allocation4], 1
    %16 = vsyncpa %s15, 0
    loop: start=0, step=1, limit=6
    $region2: #{tpu_custom_call.1} parent=1 // loop_pre_header
      _
    $region3: #{tpu_custom_call.1} parent=1 // loop_header
      %s18 = sphi 0, %s22
      %p19 = scmp.ge.s32.totalorder %s18, 6
      %s25 = sphi 0, %s37
      %s26 = sphi 0, %s33
      %s27 = sphi 0, %s25
      %s28 = sphi 0, %s26
      %s29 = sphi 0, %s27
      %s30 = sphi 0, %s28
      %s42 = sphi 0, %s44
      %s45 = sphi 0, %s42
      %s46 = sphi 0, %s45
      %s62 = sphi 0, %s46
      %s68 = sphi 0, %s70
      %s71 = sphi 0, %s68
      %s72 = sphi 0, %s71
      %s88 = sphi 0, %s72
      %s94 = sphi 0, %s96
      %s97 = sphi 0, %s94
      %s98 = sphi 0, %s97
      %s114 = sphi 0, %s98
      %s122 = sphi 0, %s124
      %s125 = sphi 0, %s122
      %s126 = sphi 0, %s125
      %s142 = sphi 0, %s126
    $region4: #{tpu_custom_call.1} parent=1 // loop_header_branch
      %21 = sbr.rel (%p19) target = $region8
    $region5: #{tpu_custom_call.1} parent=1 // loop_body
      %s23 = ssub.s32 %s18, 1
      %s24 = ssub.s32 %s18, 2
      %s31 = sadd.s32 1, %s26
      %p32 = scmp.ge.s32.totalorder %s31, 2
      %s33 = scalar_select %p32, 0, %s31
      %s34 = sadd.s32 1, %s25
      %s35 = scalar_select %p32, %s34, %s25
      %p36 = scmp.ge.s32.totalorder %s35, 2
      %s37 = scalar_select %p36, 0, %s35
      %s38 = ssub.s32 %s25, %s37
      %s39 = ssub.s32 %s26, %s33
      %s40 = sor.u32 %s38, %s39
      %p41 = scmp.eq.s32.totalorder %s40, 0
      %s43 = sadd.s32 %s42, 1
      %s44 = scalar_select %p41, %s42, %s43
      %p47 = pneg %p41
      %p48 = scmp.eq.s32.totalorder %s18, 3
      %p49 = por %p47, %p48
      %p50 = scmp.ne.s32.totalorder %s42, %s45
      %p51 = scmp.eq.s32.totalorder %s18, 0
      %p52 = por %p50, %p51
      %p53 = scmp.ne.s32.totalorder %s42, %s45
      %p54 = scmp.eq.s32.totalorder %s23, 3
      %p55 = por %p53, %p54
      %p56 = scmp.ne.s32.totalorder %s45, %s46
      %p57 = scmp.eq.s32.totalorder %s23, 0
      %p58 = por %p56, %p57
      %p59 = scmp.ne.s32.totalorder %s45, %s46
      %p60 = scmp.eq.s32.totalorder %s24, 3
      %p61 = por %p59, %p60
      %p63 = scmp.ne.s32.totalorder %s46, %s62
      %p64 = scmp.eq.s32.totalorder %s24, 0
      %p65 = por %p63, %p64
      %s66 = ssub.s32 %s25, %s37
      %p67 = scmp.eq.s32.totalorder %s66, 0
      %s69 = sadd.s32 %s68, 1
      %s70 = scalar_select %p67, %s68, %s69
      %p73 = pneg %p67
      %p74 = scmp.eq.s32.totalorder %s18, 3
      %p75 = por %p73, %p74
      %p76 = scmp.ne.s32.totalorder %s68, %s71
      %p77 = scmp.eq.s32.totalorder %s18, 0
      %p78 = por %p76, %p77
      %p79 = scmp.ne.s32.totalorder %s68, %s71
      %p80 = scmp.eq.s32.totalorder %s23, 3
      %p81 = por %p79, %p80
      %p82 = scmp.ne.s32.totalorder %s71, %s72
      %p83 = scmp.eq.s32.totalorder %s23, 0
      %p84 = por %p82, %p83
      %p85 = scmp.ne.s32.totalorder %s71, %s72
      %p86 = scmp.eq.s32.totalorder %s24, 3
      %p87 = por %p85, %p86
      %p89 = scmp.ne.s32.totalorder %s72, %s88
      %p90 = scmp.eq.s32.totalorder %s24, 0
      %p91 = por %p89, %p90
      %s92 = ssub.s32 %s26, %s33
      %p93 = scmp.eq.s32.totalorder %s92, 0
      %s95 = sadd.s32 %s94, 1
      %s96 = scalar_select %p93, %s94, %s95
      %p99 = pneg %p93
      %p100 = scmp.eq.s32.totalorder %s18, 3
      %p101 = por %p99, %p100
      %p102 = scmp.ne.s32.totalorder %s94, %s97
      %p103 = scmp.eq.s32.totalorder %s18, 0
      %p104 = por %p102, %p103
      %p105 = scmp.ne.s32.totalorder %s94, %s97
      %p106 = scmp.eq.s32.totalorder %s23, 3
      %p107 = por %p105, %p106
      %p108 = scmp.ne.s32.totalorder %s97, %s98
      %p109 = scmp.eq.s32.totalorder %s23, 0
      %p110 = por %p108, %p109
      %p111 = scmp.ne.s32.totalorder %s97, %s98
      %p112 = scmp.eq.s32.totalorder %s24, 3
      %p113 = por %p111, %p112
      %p115 = scmp.ne.s32.totalorder %s98, %s114
      %p116 = scmp.eq.s32.totalorder %s24, 0
      %p117 = por %p115, %p116
      %s118 = ssub.s32 %s25, %s37
      %s119 = ssub.s32 %s26, %s33
      %s120 = sor.u32 %s118, %s119
      %p121 = scmp.eq.s32.totalorder %s120, 0
      %s123 = sadd.s32 %s122, 1
      %s124 = scalar_select %p121, %s122, %s123
      %p127 = pneg %p121
      %p128 = scmp.eq.s32.totalorder %s18, 3
      %p129 = por %p127, %p128
      %p130 = scmp.ne.s32.totalorder %s122, %s125
      %p131 = scmp.eq.s32.totalorder %s18, 0
      %p132 = por %p130, %p131
      %p133 = scmp.ne.s32.totalorder %s122, %s125
      %p134 = scmp.eq.s32.totalorder %s23, 3
      %p135 = por %p133, %p134
      %p136 = scmp.ne.s32.totalorder %s125, %s126
      %p137 = scmp.eq.s32.totalorder %s23, 0
      %p138 = por %p136, %p137
      %p139 = scmp.ne.s32.totalorder %s125, %s126
      %p140 = scmp.eq.s32.totalorder %s24, 3
      %p141 = por %p139, %p140
      %p143 = scmp.ne.s32.totalorder %s126, %s142
      %p144 = scmp.eq.s32.totalorder %s24, 0
      %p145 = por %p143, %p144
      %p146 = scmp.le.s32.totalorder 1, %s18
      %p147 = scmp.lt.s32.totalorder %s18, 5
      %p148 = pnand %p146, %p147
      %p149 = pneg %p148
      // Predicated region
      $region9: #{tpu_custom_call.1} parent=5 // pred_check
        _
      $region10: #{tpu_custom_call.1} parent=5 // pred_check_branch
        %151 = sbr.rel (%p148) target = $region12
      $region11: #{tpu_custom_call.1} parent=5 // pred_region
        %s152 = ssub.s32 %s18, 1
      $region12: #{tpu_custom_call.1} parent=5 // pred_fallthru
        _
      %p153 = scmp.lt.s32.totalorder %s18, 4
      // Predicated region
      $region13: #{tpu_custom_call.1} parent=5 // pred_check
        %p154 = pneg %p153
      $region14: #{tpu_custom_call.1} parent=5 // pred_check_branch
        %156 = sbr.rel (%p154) target = $region16
      $region15: #{tpu_custom_call.1} parent=5 // pred_region
        // Predicated region
        $region17: #{tpu_custom_call.1} parent=15 // pred_check
          %p157 = pneg %p52
        $region18: #{tpu_custom_call.1} parent=15 // pred_check_branch
          %159 = sbr.rel (%p157) target = $region20
        $region19: #{tpu_custom_call.1} parent=15 // pred_region
          %s160 = sand.u32 %s42, 1
          %s161 = scalar_lea.sflag [#allocation3], %s160
          %s162 = sand.u32 %s42, 1
          %s163 = smul.addr %s162, 256
          %s164 = scalar_lea.vmem [#allocation2], %s163
          %s165 = smul.u32 16, %s25
          %s166 = smul.u32 2, %s26
          %s168 = ssub.s32 4096, 4096
          %169 = vsyncadd %s161, %s168
          %s170 = smul.addr %s165, 4
          %s171 = sadd.s32 %s166, %s170
          %s172 = smul.addr %s171, 128
          %s173 = scalar_lea.hbm %s0, %s172
          %s174 = sshll.u32 %s164, 4
          %s175 = int_to_ptr.vmem [resolvable:$true] %s174
          %180 = dma.hbm_to_vmem [thread:$0]  %s173, 4096, %s175, %s161, 512, 256, 16
        $region20: #{tpu_custom_call.1} parent=15 // pred_fallthru
          _
        // Predicated region
        $region21: #{tpu_custom_call.1} parent=15 // pred_check
          %p181 = pneg %p78
        $region22: #{tpu_custom_call.1} parent=15 // pred_check_branch
          %183 = sbr.rel (%p181) target = $region24
        $region23: #{tpu_custom_call.1} parent=15 // pred_region
          %s184 = sand.u32 %s18, 1
          %s185 = scalar_lea.sflag [#allocation6], %s184
          %s186 = sand.u32 %s68, 1
          %s187 = smul.addr %s186, 128
          %s188 = scalar_lea.vmem [#allocation5], %s187
          %s189 = smul.u32 16, %s25
          %s191 = ssub.s32 2048, 2048
          %192 = vsyncadd %s185, %s191
          %s193 = smul.addr %s189, 128
          %s194 = scalar_lea.hbm %s1, %s193
          %s195 = sshll.u32 %s188, 4
          %s196 = int_to_ptr.vmem [resolvable:$true] %s195
          %201 = dma.hbm_to_vmem [thread:$0]  %s194, 2048, %s196, %s185, 128, 128, 8
        $region24: #{tpu_custom_call.1} parent=15 // pred_fallthru
          _
        // Predicated region
        $region25: #{tpu_custom_call.1} parent=15 // pred_check
          %p202 = pneg %p104
        $region26: #{tpu_custom_call.1} parent=15 // pred_check_branch
          %204 = sbr.rel (%p202) target = $region28
        $region27: #{tpu_custom_call.1} parent=15 // pred_region
          %s205 = sand.u32 %s18, 1
          %s206 = scalar_lea.sflag [#allocation6], %s205
          %s207 = sand.u32 %s94, 1
          %s208 = smul.addr %s207, 8
          %s209 = scalar_lea.vmem [#allocation7], %s208
          %s210 = smul.u32 2, %s26
          %s212 = ssub.s32 128, 128
          %213 = vsyncadd %s206, %s212
          %s214 = smul.addr %s210, 64
          %s215 = scalar_lea.hbm %s2, %s214
          %s217 = sshll.u32 %s209, 4
          %s218 = int_to_ptr.vmem [resolvable:$true] %s217
          %220 = dma.hbm_to_vmem [thread:$0]  %s215, 128, %s218, %s206
        $region28: #{tpu_custom_call.1} parent=15 // pred_fallthru
          _
      $region16: #{tpu_custom_call.1} parent=5 // pred_fallthru
        _
      %p221 = scmp.le.s32.totalorder 1, %s18
      %p222 = scmp.lt.s32.totalorder %s18, 5
      %p223 = pnand %p221, %p222
      %p224 = pneg %p223
      // Predicated region
      $region29: #{tpu_custom_call.1} parent=5 // pred_check
        _
      $region30: #{tpu_custom_call.1} parent=5 // pred_check_branch
        %226 = sbr.rel (%p223) target = $region32
      $region31: #{tpu_custom_call.1} parent=5 // pred_region
        %s227 = ssub.s32 %s18, 1
        %s228 = sand.u32 %s45, 1
        %s229 = scalar_lea.sflag [#allocation3], %s228
        %s230 = sand.u32 %s45, 1
        %s231 = smul.addr %s230, 256
        %s232 = scalar_lea.vmem [#allocation2], %s231
        // Predicated region
        $region33: #{tpu_custom_call.1} parent=31 // pred_check
          %p233 = pneg %p58
        $region34: #{tpu_custom_call.1} parent=31 // pred_check_branch
          %235 = sbr.rel (%p233) target = $region36
        $region35: #{tpu_custom_call.1} parent=31 // pred_region
          %236 = dma.done %s229, 4096
        $region36: #{tpu_custom_call.1} parent=31 // pred_fallthru
          _
        %s237 = sand.u32 %s23, 1
        %s238 = scalar_lea.sflag [#allocation6], %s237
        %s239 = sand.u32 %s71, 1
        %s240 = smul.addr %s239, 128
        %s241 = scalar_lea.vmem [#allocation5], %s240
        // Predicated region
        $region37: #{tpu_custom_call.1} parent=31 // pred_check
          %p242 = pneg %p84
        $region38: #{tpu_custom_call.1} parent=31 // pred_check_branch
          %244 = sbr.rel (%p242) target = $region40
        $region39: #{tpu_custom_call.1} parent=31 // pred_region
          %245 = dma.done %s238, 2048
        $region40: #{tpu_custom_call.1} parent=31 // pred_fallthru
          _
        %s246 = sand.u32 %s23, 1
        %s247 = scalar_lea.sflag [#allocation6], %s246
        %s248 = sand.u32 %s97, 1
        %s249 = smul.addr %s248, 8
        %s250 = scalar_lea.vmem [#allocation7], %s249
        // Predicated region
        $region41: #{tpu_custom_call.1} parent=31 // pred_check
          %p251 = pneg %p110
        $region42: #{tpu_custom_call.1} parent=31 // pred_check_branch
          %253 = sbr.rel (%p251) target = $region44
        $region43: #{tpu_custom_call.1} parent=31 // pred_region
          %254 = dma.done %s247, 128
        $region44: #{tpu_custom_call.1} parent=31 // pred_fallthru
          _
        %s255 = sand.u32 %s45, 1
        %s256 = scalar_lea.sflag [#allocation3], %s255
        %s257 = sand.u32 %s45, 1
        %s258 = smul.addr %s257, 256
        %s259 = scalar_lea.vmem [#allocation2], %s258
        %p260 = pneg %p58
        %p261 = pneg %p55
        %s262 = sand.u32 %s23, 1
        %s263 = scalar_lea.sflag [#allocation6], %s262
        %s264 = sand.u32 %s71, 1
        %s265 = smul.addr %s264, 128
        %s266 = scalar_lea.vmem [#allocation5], %s265
        %p267 = pneg %p84
        %p268 = pneg %p81
        %s269 = sand.u32 %s23, 1
        %s270 = scalar_lea.sflag [#allocation6], %s269
        %s271 = sand.u32 %s97, 1
        %s272 = smul.addr %s271, 8
        %s273 = scalar_lea.vmem [#allocation7], %s272
        %p274 = pneg %p110
        %p275 = pneg %p107
        %p276 = pneg %p138
        %p277 = pneg %p135
        %s278 = sand.u32 %s125, 1
        %s279 = scalar_lea.sflag [#allocation4], %s278
        %s280 = sand.u32 %s125, 1
        %s281 = smul.addr %s280, 256
        %s282 = scalar_lea.vmem [#allocation8], %s281
        %s283 = smul.u32 16, %s27
        %s284 = smul.u32 2, %s28
        %s285 = smul.u32 16, %s27
        %s286 = smul.u32 2, %s28
        %s287 = smul.u32 16, %s27
        %s288 = smul.u32 2, %s28
        %v289 = vld [vmem:[%s250] sm:$0xff]
        %v290 = vmul.f32 %v289, 2.0
        %v291 = vld [vmem:[%s241] sm:$0xff]
        %v292 = vld [vmem:[%s241 + $0x8] sm:$0xff]
        %v293 = vld [vmem:[%s241 + $0x10] sm:$0xff]
        %v294 = vld [vmem:[%s241 + $0x18] sm:$0xff]
        %v295 = vld [vmem:[%s241 + $0x20] sm:$0xff]
        %v296 = vld [vmem:[%s241 + $0x28] sm:$0xff]
        %v297 = vld [vmem:[%s241 + $0x30] sm:$0xff]
        %v298 = vld [vmem:[%s241 + $0x38] sm:$0xff]
        %v299 = vld [vmem:[%s241 + $0x40] sm:$0xff]
        %v300 = vld [vmem:[%s241 + $0x48] sm:$0xff]
        %v301 = vld [vmem:[%s241 + $0x50] sm:$0xff]
        %v302 = vld [vmem:[%s241 + $0x58] sm:$0xff]
        %v303 = vld [vmem:[%s241 + $0x60] sm:$0xff]
        %v304 = vld [vmem:[%s241 + $0x68] sm:$0xff]
        %v305 = vld [vmem:[%s241 + $0x70] sm:$0xff]
        %v306 = vld [vmem:[%s241 + $0x78] sm:$0xff]
        %v308 = vcombine.high %v290, %v290
        %vm309 = vcmask 31744
        %v311 = vsel %vm309, %v291, 0
        %v314 = vsel %vm309, %v292, 0
        %v317 = vsel %vm309, %v293, 0
        %v320 = vsel %vm309, %v294, 0
        %v323 = vsel %vm309, %v295, 0
        %v326 = vsel %vm309, %v296, 0
        %v329 = vsel %vm309, %v297, 0
        %v332 = vsel %vm309, %v298, 0
        %v335 = vsel %vm309, %v299, 0
        %v338 = vsel %vm309, %v300, 0
        %v341 = vsel %vm309, %v301, 0
        %v344 = vsel %vm309, %v302, 0
        %v347 = vsel %vm309, %v303, 0
        %v350 = vsel %vm309, %v304, 0
        %v353 = vsel %vm309, %v305, 0
        %v356 = vsel %vm309, %v306, 0
        %vm358 = vcmask 1043456
        %v359 = vsel %vm358, %v290, 0
        %v361 = vsel %vm358, %v308, 0
        %363 = vmatprep.subr.mxu0 %v361
        %364 = vmatpush1.msra.mxu0 %v359
        %365 = vmatprep.subr.mxu0 0.0
        %366 = vmatpush1.msra.mxu0 0.0
        %367 = vmatprep.subr.mxu0 0.0
        %368 = vmatpush1.msra.mxu0 0.0
        %369 = vmatprep.subr.mxu0 0.0
        %370 = vmatpush1.msra.mxu0 0.0
        %371 = vmatprep.subr.mxu0 0.0
        %372 = vmatpush1.msra.mxu0 0.0
        %373 = vmatprep.subr.mxu0 0.0
        %374 = vmatpush1.msra.mxu0 0.0
        %375 = vmatprep.subr.mxu0 0.0
        %376 = vmatpush1.msra.mxu0 0.0
        %377 = vmatprep.subr.mxu0 0.0
        %378 = vmatpush1.msra.mxu0 0.0
        %379 = vmatprep.subr.mxu0 0.0
        %380 = vmatpush1.msra.mxu0 0.0
        %381 = vmatprep.subr.mxu0 0.0
        %382 = vmatpush1.msra.mxu0 0.0
        %383 = vmatprep.subr.mxu0 0.0
        %384 = vmatpush1.msra.mxu0 0.0
        %385 = vmatprep.subr.mxu0 0.0
        %386 = vmatpush1.msra.mxu0 0.0
        %387 = vmatprep.subr.mxu0 0.0
        %388 = vmatpush1.msra.mxu0 0.0
        %389 = vmatprep.subr.mxu0 0.0
        %390 = vmatpush1.msra.mxu0 0.0
        %391 = vmatprep.subr.mxu0 0.0
        %392 = vmatpush1.msra.mxu0 0.0
        %393 = vmatprep.subr.mxu0 0.0
        %394 = vmatpush1.msra.mxu0 0.0
        %395 = vmatprep.subr.mxu0 0.0
        %396 = vmatpush1.msra.mxu0 0.0
        %397 = vmatprep.subr.mxu0 0.0
        %398 = vmatpush1.msra.mxu0 0.0
        %399 = vmatprep.subr.mxu0 0.0
        %400 = vmatpush1.msra.mxu0 0.0
        %401 = vmatprep.subr.mxu0 0.0
        %402 = vmatpush1.msra.mxu0 0.0
        %403 = vmatprep.subr.mxu0 0.0
        %404 = vmatpush1.msra.mxu0 0.0
        %405 = vmatprep.subr.mxu0 0.0
        %406 = vmatpush1.msra.mxu0 0.0
        %407 = vmatprep.subr.mxu0 0.0
        %408 = vmatpush1.msra.mxu0 0.0
        %409 = vmatprep.subr.mxu0 0.0
        %410 = vmatpush1.msra.mxu0 0.0
        %411 = vmatprep.subr.mxu0 0.0
        %412 = vmatpush1.msra.mxu0 0.0
        %413 = vmatprep.subr.mxu0 0.0
        %414 = vmatpush1.msra.mxu0 0.0
        %415 = vmatprep.subr.mxu0 0.0
        %416 = vmatpush1.msra.mxu0 0.0
        %417 = vmatprep.subr.mxu0 0.0
        %418 = vmatpush1.msra.mxu0 0.0
        %419 = vmatprep.subr.mxu0 0.0
        %420 = vmatpush1.msra.mxu0 0.0
        %421 = vmatprep.subr.mxu0 0.0
        %422 = vmatpush1.msra.mxu0 0.0
        %423 = vmatprep.subr.mxu0 0.0
        %424 = vmatpush1.msra.mxu0 0.0
        %425 = vmatprep.subr.mxu0 0.0
        %426 = vmatpush1.msra.mxu0 0.0
        %427 = vmatprep.mubr.f32.mxu0 0.0
        %428 = vmatmul.mubr.f32.gmra.mrb[0].mxu0 %v311
        %v429 = vpop.f32.mrb[0].mxu0
        %v430 = vadd.f32 0.0, %v429
        %v431 = vpop.f32.mrb[0].mxu0
        %v432 = vadd.f32 0.0, %v431
        %433 = vmatprep.mubr.f32.mxu0 0.0
        %434 = vmatmul.mubr.f32.gmra.mrb[0].mxu0 %v314
        %v435 = vpop.f32.mrb[0].mxu0
        %v436 = vadd.f32 0.0, %v435
        %v437 = vpop.f32.mrb[0].mxu0
        %v438 = vadd.f32 0.0, %v437
        %439 = vmatprep.mubr.f32.mxu0 0.0
        %440 = vmatmul.mubr.f32.gmra.mrb[0].mxu0 %v317
        %v441 = vpop.f32.mrb[0].mxu0
        %v442 = vadd.f32 0.0, %v441
        %v443 = vpop.f32.mrb[0].mxu0
        %v444 = vadd.f32 0.0, %v443
        %445 = vmatprep.mubr.f32.mxu0 0.0
        %446 = vmatmul.mubr.f32.gmra.mrb[0].mxu0 %v320
        %v447 = vpop.f32.mrb[0].mxu0
        %v448 = vadd.f32 0.0, %v447
        %v449 = vpop.f32.mrb[0].mxu0
        %v450 = vadd.f32 0.0, %v449
        %451 = vmatprep.mubr.f32.mxu0 0.0
        %452 = vmatmul.mubr.f32.gmra.mrb[0].mxu0 %v323
        %v453 = vpop.f32.mrb[0].mxu0
        %v454 = vadd.f32 0.0, %v453
        %v455 = vpop.f32.mrb[0].mxu0
        %v456 = vadd.f32 0.0, %v455
        %457 = vmatprep.mubr.f32.mxu0 0.0
        %458 = vmatmul.mubr.f32.gmra.mrb[0].mxu0 %v326
        %v459 = vpop.f32.mrb[0].mxu0
        %v460 = vadd.f32 0.0, %v459
        %v461 = vpop.f32.mrb[0].mxu0
        %v462 = vadd.f32 0.0, %v461
        %463 = vmatprep.mubr.f32.mxu0 0.0
        %464 = vmatmul.mubr.f32.gmra.mrb[0].mxu0 %v329
        %v465 = vpop.f32.mrb[0].mxu0
        %v466 = vadd.f32 0.0, %v465
        %v467 = vpop.f32.mrb[0].mxu0
        %v468 = vadd.f32 0.0, %v467
        %469 = vmatprep.mubr.f32.mxu0 0.0
        %470 = vmatmul.mubr.f32.gmra.mrb[0].mxu0 %v332
        %v471 = vpop.f32.mrb[0].mxu0
        %v472 = vadd.f32 0.0, %v471
        %v473 = vpop.f32.mrb[0].mxu0
        %v474 = vadd.f32 0.0, %v473
        %475 = vmatprep.mubr.f32.mxu0 0.0
        %476 = vmatmul.mubr.f32.gmra.mrb[0].mxu0 %v335
        %v477 = vpop.f32.mrb[0].mxu0
        %v478 = vadd.f32 0.0, %v477
        %v479 = vpop.f32.mrb[0].mxu0
        %v480 = vadd.f32 0.0, %v479
        %481 = vmatprep.mubr.f32.mxu0 0.0
        %482 = vmatmul.mubr.f32.gmra.mrb[0].mxu0 %v338
        %v483 = vpop.f32.mrb[0].mxu0
        %v484 = vadd.f32 0.0, %v483
        %v485 = vpop.f32.mrb[0].mxu0
        %v486 = vadd.f32 0.0, %v485
        %487 = vmatprep.mubr.f32.mxu0 0.0
        %488 = vmatmul.mubr.f32.gmra.mrb[0].mxu0 %v341
        %v489 = vpop.f32.mrb[0].mxu0
        %v490 = vadd.f32 0.0, %v489
        %v491 = vpop.f32.mrb[0].mxu0
        %v492 = vadd.f32 0.0, %v491
        %493 = vmatprep.mubr.f32.mxu0 0.0
        %494 = vmatmul.mubr.f32.gmra.mrb[0].mxu0 %v344
        %v495 = vpop.f32.mrb[0].mxu0
        %v496 = vadd.f32 0.0, %v495
        %v497 = vpop.f32.mrb[0].mxu0
        %v498 = vadd.f32 0.0, %v497
        %499 = vmatprep.mubr.f32.mxu0 0.0
        %500 = vmatmul.mubr.f32.gmra.mrb[0].mxu0 %v347
        %v501 = vpop.f32.mrb[0].mxu0
        %v502 = vadd.f32 0.0, %v501
        %v503 = vpop.f32.mrb[0].mxu0
        %v504 = vadd.f32 0.0, %v503
        %505 = vmatprep.mubr.f32.mxu0 0.0
        %506 = vmatmul.mubr.f32.gmra.mrb[0].mxu0 %v350
        %v507 = vpop.f32.mrb[0].mxu0
        %v508 = vadd.f32 0.0, %v507
        %v509 = vpop.f32.mrb[0].mxu0
        %v510 = vadd.f32 0.0, %v509
        %511 = vmatprep.mubr.f32.mxu0 0.0
        %512 = vmatmul.mubr.f32.gmra.mrb[0].mxu0 %v353
        %v513 = vpop.f32.mrb[0].mxu0
        %v514 = vadd.f32 0.0, %v513
        %v515 = vpop.f32.mrb[0].mxu0
        %v516 = vadd.f32 0.0, %v515
        %517 = vmatprep.mubr.f32.mxu0 0.0
        %518 = vmatmul.mubr.f32.gmra.mrb[0].mxu0 %v356
        %v519 = vpop.f32.mrb[0].mxu0
        %v520 = vadd.f32 0.0, %v519
        %v521 = vpop.f32.mrb[0].mxu0
        %v522 = vadd.f32 0.0, %v521
        %523 = vdwg.mxu0
        %v524 = vld [vmem:[%s232] sm:$0xff]
        %v525 = vld [vmem:[%s232 + $0x8] sm:$0xff]
        %v526 = vld [vmem:[%s232 + $0x10] sm:$0xff]
        %v527 = vld [vmem:[%s232 + $0x18] sm:$0xff]
        %v528 = vld [vmem:[%s232 + $0x20] sm:$0xff]
        %v529 = vld [vmem:[%s232 + $0x28] sm:$0xff]
        %v530 = vld [vmem:[%s232 + $0x30] sm:$0xff]
        %v531 = vld [vmem:[%s232 + $0x38] sm:$0xff]
        %v532 = vld [vmem:[%s232 + $0x40] sm:$0xff]
        %v533 = vld [vmem:[%s232 + $0x48] sm:$0xff]
        %v534 = vld [vmem:[%s232 + $0x50] sm:$0xff]
        %v535 = vld [vmem:[%s232 + $0x58] sm:$0xff]
        %v536 = vld [vmem:[%s232 + $0x60] sm:$0xff]
        %v537 = vld [vmem:[%s232 + $0x68] sm:$0xff]
        %v538 = vld [vmem:[%s232 + $0x70] sm:$0xff]
        %v539 = vld [vmem:[%s232 + $0x78] sm:$0xff]
        %v540 = vld [vmem:[%s232 + $0x80] sm:$0xff]
        %v541 = vld [vmem:[%s232 + $0x88] sm:$0xff]
        %v542 = vld [vmem:[%s232 + $0x90] sm:$0xff]
        %v543 = vld [vmem:[%s232 + $0x98] sm:$0xff]
        %v544 = vld [vmem:[%s232 + $0xa0] sm:$0xff]
        %v545 = vld [vmem:[%s232 + $0xa8] sm:$0xff]
        %v546 = vld [vmem:[%s232 + $0xb0] sm:$0xff]
        %v547 = vld [vmem:[%s232 + $0xb8] sm:$0xff]
        %v548 = vld [vmem:[%s232 + $0xc0] sm:$0xff]
        %v549 = vld [vmem:[%s232 + $0xc8] sm:$0xff]
        %v550 = vld [vmem:[%s232 + $0xd0] sm:$0xff]
        %v551 = vld [vmem:[%s232 + $0xd8] sm:$0xff]
        %v552 = vld [vmem:[%s232 + $0xe0] sm:$0xff]
        %v553 = vld [vmem:[%s232 + $0xe8] sm:$0xff]
        %v554 = vld [vmem:[%s232 + $0xf0] sm:$0xff]
        %v555 = vld [vmem:[%s232 + $0xf8] sm:$0xff]
        %v556 = vadd.f32 %v524, %v430
        %v557 = vadd.f32 %v525, %v432
        %v558 = vadd.f32 %v526, %v436
        %v559 = vadd.f32 %v527, %v438
        %v560 = vadd.f32 %v528, %v442
        %v561 = vadd.f32 %v529, %v444
        %v562 = vadd.f32 %v530, %v448
        %v563 = vadd.f32 %v531, %v450
        %v564 = vadd.f32 %v532, %v454
        %v565 = vadd.f32 %v533, %v456
        %v566 = vadd.f32 %v534, %v460
        %v567 = vadd.f32 %v535, %v462
        %v568 = vadd.f32 %v536, %v466
        %v569 = vadd.f32 %v537, %v468
        %v570 = vadd.f32 %v538, %v472
        %v571 = vadd.f32 %v539, %v474
        %v572 = vadd.f32 %v540, %v478
        %v573 = vadd.f32 %v541, %v480
        %v574 = vadd.f32 %v542, %v484
        %v575 = vadd.f32 %v543, %v486
        %v576 = vadd.f32 %v544, %v490
        %v577 = vadd.f32 %v545, %v492
        %v578 = vadd.f32 %v546, %v496
        %v579 = vadd.f32 %v547, %v498
        %v580 = vadd.f32 %v548, %v502
        %v581 = vadd.f32 %v549, %v504
        %v582 = vadd.f32 %v550, %v508
        %v583 = vadd.f32 %v551, %v510
        %v584 = vadd.f32 %v552, %v514
        %v585 = vadd.f32 %v553, %v516
        %v586 = vadd.f32 %v554, %v520
        %v587 = vadd.f32 %v555, %v522
        %588 = vst [vmem:[%s282] sm:$0xff] %v556
        %589 = vst [vmem:[%s282 + $0x8] sm:$0xff] %v557
        %590 = vst [vmem:[%s282 + $0x10] sm:$0xff] %v558
        %591 = vst [vmem:[%s282 + $0x18] sm:$0xff] %v559
        %592 = vst [vmem:[%s282 + $0x20] sm:$0xff] %v560
        %593 = vst [vmem:[%s282 + $0x28] sm:$0xff] %v561
        %594 = vst [vmem:[%s282 + $0x30] sm:$0xff] %v562
        %595 = vst [vmem:[%s282 + $0x38] sm:$0xff] %v563
        %596 = vst [vmem:[%s282 + $0x40] sm:$0xff] %v564
        %597 = vst [vmem:[%s282 + $0x48] sm:$0xff] %v565
        %598 = vst [vmem:[%s282 + $0x50] sm:$0xff] %v566
        %599 = vst [vmem:[%s282 + $0x58] sm:$0xff] %v567
        %600 = vst [vmem:[%s282 + $0x60] sm:$0xff] %v568
        %601 = vst [vmem:[%s282 + $0x68] sm:$0xff] %v569
        %602 = vst [vmem:[%s282 + $0x70] sm:$0xff] %v570
        %603 = vst [vmem:[%s282 + $0x78] sm:$0xff] %v571
        %604 = vst [vmem:[%s282 + $0x80] sm:$0xff] %v572
        %605 = vst [vmem:[%s282 + $0x88] sm:$0xff] %v573
        %606 = vst [vmem:[%s282 + $0x90] sm:$0xff] %v574
        %607 = vst [vmem:[%s282 + $0x98] sm:$0xff] %v575
        %608 = vst [vmem:[%s282 + $0xa0] sm:$0xff] %v576
        %609 = vst [vmem:[%s282 + $0xa8] sm:$0xff] %v577
        %610 = vst [vmem:[%s282 + $0xb0] sm:$0xff] %v578
        %611 = vst [vmem:[%s282 + $0xb8] sm:$0xff] %v579
        %612 = vst [vmem:[%s282 + $0xc0] sm:$0xff] %v580
        %613 = vst [vmem:[%s282 + $0xc8] sm:$0xff] %v581
        %614 = vst [vmem:[%s282 + $0xd0] sm:$0xff] %v582
        %615 = vst [vmem:[%s282 + $0xd8] sm:$0xff] %v583
        %616 = vst [vmem:[%s282 + $0xe0] sm:$0xff] %v584
        %617 = vst [vmem:[%s282 + $0xe8] sm:$0xff] %v585
        %618 = vst [vmem:[%s282 + $0xf0] sm:$0xff] %v586
        %619 = vst [vmem:[%s282 + $0xf8] sm:$0xff] %v587
        %s620 = sand.u32 %s125, 1
        %s621 = scalar_lea.sflag [#allocation4], %s620
        %s622 = sand.u32 %s125, 1
        %s623 = smul.addr %s622, 256
        %s624 = scalar_lea.vmem [#allocation8], %s623
        // Predicated region
        $region45: #{tpu_custom_call.1} parent=31 // pred_check
          %p625 = pneg %p135
        $region46: #{tpu_custom_call.1} parent=31 // pred_check_branch
          %627 = sbr.rel (%p625) target = $region48
        $region47: #{tpu_custom_call.1} parent=31 // pred_region
          %s628 = smul.u32 16, %s27
          %s629 = smul.u32 2, %s28
          %s631 = ssub.s32 4096, 4096
          %632 = vsyncadd %s621, %s631
          %s633 = smul.addr %s628, 4
          %s634 = sadd.s32 %s629, %s633
          %s635 = smul.addr %s634, 128
          %s636 = scalar_lea.hbm %s3, %s635
          %s637 = sshll.u32 %s624, 4
          %s638 = int_to_ptr.vmem [resolvable:$true] %s637
          %643 = dma.vmem_to_hbm [thread:$0]  %s638, 4096, %s636, %s621, 256, 512, 16
        $region48: #{tpu_custom_call.1} parent=31 // pred_fallthru
          _
      $region32: #{tpu_custom_call.1} parent=5 // pred_fallthru
        _
      %p644 = scmp.le.s32.totalorder 2, %s18
      // Predicated region
      $region49: #{tpu_custom_call.1} parent=5 // pred_check
        %p645 = pneg %p644
      $region50: #{tpu_custom_call.1} parent=5 // pred_check_branch
        %647 = sbr.rel (%p645) target = $region52
      $region51: #{tpu_custom_call.1} parent=5 // pred_region
        %s648 = ssub.s32 %s18, 2
        // Predicated region
        $region53: #{tpu_custom_call.1} parent=51 // pred_check
          %p649 = pneg %p141
        $region54: #{tpu_custom_call.1} parent=51 // pred_check_branch
          %651 = sbr.rel (%p649) target = $region56
        $region55: #{tpu_custom_call.1} parent=51 // pred_region
          %s652 = sand.u32 %s126, 1
          %s653 = scalar_lea.sflag [#allocation4], %s652
          %s654 = sand.u32 %s126, 1
          %s655 = smul.addr %s654, 256
          %s656 = scalar_lea.vmem [#allocation8], %s655
          %657 = dma.done %s653, 4096
        $region56: #{tpu_custom_call.1} parent=51 // pred_fallthru
          _
      $region52: #{tpu_custom_call.1} parent=5 // pred_fallthru
        _
    $region6: #{tpu_custom_call.1} parent=1 // loop_footer
      %s22 = sadd.s32 1, %s18
    $region7: #{tpu_custom_call.1} parent=1 // loop_footer_branch
      %17 = sbr.rel target = $region3
    $region8: #{tpu_custom_call.1} parent=1 // loop_exit
      _
    %658 = vsyncpa [#allocation3], 1
    %s659 = scalar_lea.sflag [#allocation3], 1
    %660 = vsyncpa %s659, 1
    %661 = vsyncpa [#allocation6], 1
    %s662 = scalar_lea.sflag [#allocation6], 1
    %663 = vsyncpa %s662, 1
    %664 = vsyncpa [#allocation4], 1
    %s665 = scalar_lea.sflag [#allocation4], 1
    %666 = vsyncpa %s665, 1

</llo_original>
